<compile_context>
chip_gen: v6e
topology: v6e:2x2x1
jax: 0.10.0
libtpu: 0.0.40
codegen_flags: <defaults>
</compile_context>

<pallas_src>
import jax
import jax.numpy as jnp
from jax import lax
from jax.experimental import pallas as pl
from jax.experimental.pallas import tpu as pltpu
import numpy as np


def basic_block(x, w1, bn1s, bn1b, w2, bn2s, bn2b,
                se_w1, se_b1, se_w2, se_b2, wd, bnds, bndb):
    """Fused BasicBlock forward.

    x:  (N, Cin, H, W) float32 (NCHW, PyTorch-native)
    w1: (3, 3, Cin, Cout)   conv1 weights (HWIO)
    w2: (3, 3, Cout, Cout)  conv2 weights (HWIO)
    wd: (Cin, Cout)         downsample 1x1 conv weights
    bn*s / bn*b: (Cout,)    folded BatchNorm scale / shift
    se_w1: (Cout, Cr), se_b1: (Cr,), se_w2: (Cr, Cout), se_b2: (Cout,)
    returns (N, Cout, H, W) float32
    """
    N, Cin, H, W = x.shape
    Cout = w1.shape[-1]
    Cr = se_w1.shape[-1]
    HW = H * W
    PAD = ((W + 1 + 127) // 128) * 128          # lane-aligned halo pad (>= W+1)
    HWP = HW + 2 * PAD

    # ---------- host-side weight packing (free, outside the kernel) ----------
    # conv1 as (Cout, 9*Cin), column index = tap*Cin + cin, BN1 scale folded in.
    w1k = jnp.transpose(w1.reshape(9, Cin, Cout), (2, 0, 1)).reshape(Cout, 9 * Cin)
    w1k = w1k * bn1s[:, None]
    # downsample 1x1 placed at the center tap (tap 4) columns, zero elsewhere,
    # BN_down scale folded in, so conv1 + downsample become one
    # (2*Cout, 9*Cin) @ (9*Cin, HW) matmul.
    wd_pack = jnp.zeros((Cout, 9 * Cin), jnp.float32)
    wd_pack = wd_pack.at[:, 4 * Cin:5 * Cin].set(wd.T * bnds[:, None])
    w1c = jnp.concatenate([w1k, wd_pack], axis=0).astype(jnp.bfloat16)
    # conv2 as (Cout, 9*Cout), BN2 scale folded in.
    w2k = jnp.transpose(w2.reshape(9, Cout, Cout), (2, 0, 1)).reshape(Cout, 9 * Cout)
    w2k = (w2k * bn2s[:, None]).astype(jnp.bfloat16)

    # bf16 activations at the boundary (kernel uses bf16 MXU operands anyway).
    x_flat = x.reshape(N, Cin, HW).astype(jnp.bfloat16)

    # Horizontal edge masks, precomputed once on the host: row 0 zeroes column 0
    # (dx = -1 taps), row 1 zeroes column W-1 (dx = +1 taps).
    colids = jnp.arange(HW, dtype=jnp.int32) % W
    edge_masks = jnp.stack([(colids != 0), (colids != W - 1)]).astype(jnp.bfloat16)

    # Pack the four per-channel shift vectors into one (Cout, 4) f32 operand:
    # col 0 = bn1b, col 1 = bn2b, col 2 = bndb, col 3 = se_b2.
    cparams = jnp.stack([bn1b, bn2b, bndb, se_b2], axis=1).astype(jnp.float32)

    se_w1f = se_w1.astype(jnp.float32)                       # (Cout, Cr)
    se_b1f = se_b1.reshape(1, Cr).astype(jnp.float32)        # (1, Cr)
    se_w2t = se_w2.T.astype(jnp.float32)                     # (Cout, Cr)

    def kernel(x_ref, w1c_ref, w2_ref, masks_ref, cpar_ref,
               sew1_ref, seb1_ref, sew2t_ref,
               out_ref, xpad_ref, ypad_ref):
        not_left = masks_ref[0:1, :]                         # (1, HW) bf16
        not_right = masks_ref[1:2, :]

        def im2col(src_pad_ref):
            # slab[k*c + ci, p] = src[ci, p + dy*W + dx]  (0 outside the image)
            # Built entirely in registers; fed straight to the MXU.
            pieces = []
            for k in range(9):
                dy, dx = k // 3 - 1, k % 3 - 1
                off = dy * W + dx
                tap = src_pad_ref[:, PAD + off:PAD + off + HW]   # (c, HW) bf16
                if dx == -1:
                    tap = tap * not_left
                elif dx == 1:
                    tap = tap * not_right
                pieces.append(tap)
            return jnp.concatenate(pieces, axis=0)               # (9*c, HW) bf16

        # ---- stage conv1 input: zero halo strips (O(pad)) + interior copy ----
        # (re-zeroed every grid step so the batch axis stays megacore-safe)
        xpad_ref[:, 0:PAD] = jnp.zeros((Cin, PAD), jnp.bfloat16)
        xpad_ref[:, PAD + HW:HWP] = jnp.zeros((Cin, PAD), jnp.bfloat16)
        xpad_ref[:, PAD:PAD + HW] = x_ref[0]

        # ---- conv1 (3x3) + downsample (1x1) fused into one MXU matmul ----
        acc = jnp.dot(w1c_ref[...], im2col(xpad_ref),
                      preferred_element_type=jnp.float32)        # (2*Cout, HW)
        y = jnp.maximum(acc[:Cout] + cpar_ref[:, 0:1], 0.0)      # BN1 shift + ReLU
        ident = acc[Cout:] + cpar_ref[:, 2:3]                    # BN_down shift

        # ---- conv2 (3x3) ----
        ypad_ref[:, 0:PAD] = jnp.zeros((Cout, PAD), jnp.bfloat16)
        ypad_ref[:, PAD + HW:HWP] = jnp.zeros((Cout, PAD), jnp.bfloat16)
        ypad_ref[:, PAD:PAD + HW] = y.astype(jnp.bfloat16)
        z = jnp.dot(w2_ref[...], im2col(ypad_ref),
                    preferred_element_type=jnp.float32)          # (Cout, HW)
        z = z + cpar_ref[:, 1:2]                                 # BN2 shift

        # ---- SE: squeeze -> FC/ReLU -> FC/sigmoid -> channel gate (all f32) ----
        # Tiny FCs as broadcast-mul + reduce (VPU/XLU), not M=1 MXU matmuls.
        s = jnp.mean(z, axis=1, keepdims=True)                   # (Cout, 1)
        h = jnp.maximum(jnp.sum(sew1_ref[...] * s, axis=0, keepdims=True)
                        + seb1_ref[...], 0.0)                    # (1, Cr)
        g = jax.nn.sigmoid(jnp.sum(sew2t_ref[...] * h, axis=1, keepdims=True)
                           + cpar_ref[:, 3:4])                   # (Cout, 1)

        # ---- residual add + ReLU (lane-dense store: minor dim = HW) ----
        out_ref[0] = jnp.maximum(z * g + ident, 0.0)

    full = lambda shape: pl.BlockSpec(shape, lambda b: (0,) * len(shape))

    out_flat = pl.pallas_call(
        kernel,
        out_shape=jax.ShapeDtypeStruct((N, Cout, HW), jnp.float32),
        grid=(N,),
        in_specs=[
            pl.BlockSpec((1, Cin, HW), lambda b: (b, 0, 0)),     # x (bf16)
            full((2 * Cout, 9 * Cin)),                           # conv1 + downsample weights
            full((Cout, 9 * Cout)),                              # conv2 weights
            full((2, HW)),                                       # edge masks
            full((Cout, 4)),                                     # packed per-channel shifts
            full((Cout, Cr)),                                    # SE fc1 weights
            full((1, Cr)),                                       # SE fc1 bias
            full((Cout, Cr)),                                    # SE fc2 weights (transposed)
        ],
        out_specs=pl.BlockSpec((1, Cout, HW), lambda b: (b, 0, 0)),
        scratch_shapes=[
            pltpu.VMEM((Cin, HWP), jnp.bfloat16),       # padded conv1 input
            pltpu.VMEM((Cout, HWP), jnp.bfloat16),      # padded conv2 input
        ],
        compiler_params=pltpu.CompilerParams(
            dimension_semantics=("parallel",),          # batch -> both TCs on v7x
            vmem_limit_bytes=32 * 1024 * 1024),
    )(x_flat, w1c, w2k, edge_masks, cparams, se_w1f, se_b1f, se_w2t)

    return out_flat.reshape(N, Cout, H, W)


# ---------------- pure-JAX reference (for correctness check) ----------------
def ref_basic_block(x, w1, bn1s, bn1b, w2, bn2s, bn2b,
                    se_w1, se_b1, se_w2, se_b2, wd, bnds, bndb):
    # Operands are rounded through bf16 (mimics the kernel's MXU policy) but all
    # dots/convs run in f32 — avoids bf16xbf16->f32 dots that the CPU DotThunk
    # used in interpret-mode checking cannot execute.
    f32 = jnp.float32
    q = lambda t: t.astype(jnp.bfloat16).astype(f32)
    cshape = lambda v: v.reshape(1, -1, 1, 1)

    def conv3x3(inp, w):
        return lax.conv_general_dilated(
            q(inp), q(w), window_strides=(1, 1), padding="SAME",
            dimension_numbers=("NCHW", "HWIO", "NCHW"))

    y = jax.nn.relu(conv3x3(x, w1) * cshape(bn1s) + cshape(bn1b))
    z = conv3x3(y, w2) * cshape(bn2s) + cshape(bn2b)
    s = z.mean(axis=(2, 3))                                    # (N, Cout)
    h = jax.nn.relu(s @ se_w1 + se_b1)
    g = jax.nn.sigmoid(h @ se_w2 + se_b2)
    z = z * g[:, :, None, None]
    ident = jnp.einsum("nchw,cd->ndhw", q(x), q(wd))
    ident = ident * cshape(bnds) + cshape(bndb)
    return jax.nn.relu(z + ident)


def make_bn(key, c):
    k1, k2, k3, k4 = jax.random.split(key, 4)
    gamma = 1.0 + 0.1 * jax.random.normal(k1, (c,), jnp.float32)
    beta = 0.1 * jax.random.normal(k2, (c,), jnp.float32)
    mean = 0.05 * jax.random.normal(k3, (c,), jnp.float32)
    var = 1.0 + 0.2 * jax.random.uniform(k4, (c,), jnp.float32)
    scale = gamma / jnp.sqrt(var + 1e-5)
    shift = beta - mean * scale
    return scale, shift


if __name__ == "__main__":
    N, H, W = 2, 16, 16
    Cin, Cout = 4, 8
    Cr = max(Cout // 4, 1)       # SE reduction = 4

    key = jax.random.PRNGKey(0)
    ks = jax.random.split(key, 12)

    x = jax.random.normal(ks[0], (N, Cin, H, W), jnp.float32)
    w1 = 0.2 * jax.random.normal(ks[1], (3, 3, Cin, Cout), jnp.float32)
    w2 = 0.2 * jax.random.normal(ks[2], (3, 3, Cout, Cout), jnp.float32)
    wd = 0.2 * jax.random.normal(ks[3], (Cin, Cout), jnp.float32)
    se_w1 = 0.3 * jax.random.normal(ks[4], (Cout, Cr), jnp.float32)
    se_b1 = 0.1 * jax.random.normal(ks[5], (Cr,), jnp.float32)
    se_w2 = 0.3 * jax.random.normal(ks[6], (Cr, Cout), jnp.float32)
    se_b2 = 0.1 * jax.random.normal(ks[7], (Cout,), jnp.float32)
    bn1s, bn1b = make_bn(ks[8], Cout)
    bn2s, bn2b = make_bn(ks[9], Cout)
    bnds, bndb = make_bn(ks[10], Cout)

    args = (x, w1, bn1s, bn1b, w2, bn2s, bn2b,
            se_w1, se_b1, se_w2, se_b2, wd, bnds, bndb)

    out = jax.block_until_ready(basic_block(*args))
    ref = jax.block_until_ready(ref_basic_block(*args))

    assert out.shape == (N, Cout, H, W), out.shape
    np.testing.assert_allclose(np.asarray(out), np.asarray(ref),
                               rtol=2e-2, atol=2e-2)
    print("KERNEL_OK")
</pallas_src>

<mosaic_0001>
module attributes {stable_mosaic.version = 11 : i64} {
  func.func @kernel(%arg0: i32, %arg1: memref<1x4x256xbf16, #tpu.memory_space<vmem>>, %arg2: memref<16x36xbf16, #tpu.memory_space<vmem>>, %arg3: memref<8x72xbf16, #tpu.memory_space<vmem>>, %arg4: memref<2x256xbf16, #tpu.memory_space<vmem>>, %arg5: memref<8x4xf32, #tpu.memory_space<vmem>>, %arg6: memref<8x2xf32, #tpu.memory_space<vmem>>, %arg7: memref<1x2xf32, #tpu.memory_space<vmem>>, %arg8: memref<8x2xf32, #tpu.memory_space<vmem>>, %arg9: memref<1x8x256xf32, #tpu.memory_space<vmem>>, %arg10: memref<4x512xbf16, #tpu.memory_space<vmem>>, %arg11: memref<8x512xbf16, #tpu.memory_space<vmem>>) attributes {dimension_semantics = [#tpu.dimension_semantics<parallel>], iteration_bounds = array<i64: 2>, scalar_prefetch = 0 : i64, scratch_operands = 2 : i64, tpu.core_type = #tpu.core_type<tc>, window_params = [{transform_indices = @transform_0, window_bounds = array<i64: 1, 4, 256>}, {pipeline_mode = #tpu.pipeline_mode<synchronous>, transform_indices = @transform_1, window_bounds = array<i64: 16, 36>}, {pipeline_mode = #tpu.pipeline_mode<synchronous>, transform_indices = @transform_2, window_bounds = array<i64: 8, 72>}, {pipeline_mode = #tpu.pipeline_mode<synchronous>, transform_indices = @transform_3, window_bounds = array<i64: 2, 256>}, {pipeline_mode = #tpu.pipeline_mode<synchronous>, transform_indices = @transform_4, window_bounds = array<i64: 8, 4>}, {pipeline_mode = #tpu.pipeline_mode<synchronous>, transform_indices = @transform_5, window_bounds = array<i64: 8, 2>}, {pipeline_mode = #tpu.pipeline_mode<synchronous>, transform_indices = @transform_6, window_bounds = array<i64: 1, 2>}, {pipeline_mode = #tpu.pipeline_mode<synchronous>, transform_indices = @transform_7, window_bounds = array<i64: 8, 2>}, {transform_indices = @transform_8, window_bounds = array<i64: 1, 8, 256>}]} {
    %c0 = arith.constant 0 : index
    %c0_0 = arith.constant 0 : index
    %0 = vector.load %arg4[%c0, %c0_0] : memref<2x256xbf16, #tpu.memory_space<vmem>>, vector<1x256xbf16>
    %c1 = arith.constant 1 : index
    %c0_1 = arith.constant 0 : index
    %1 = vector.load %arg4[%c1, %c0_1] : memref<2x256xbf16, #tpu.memory_space<vmem>>, vector<1x256xbf16>
    %cst = arith.constant 0.000000e+00 : bf16
    %2 = vector.broadcast %cst : bf16 to vector<4x128xbf16>
    %c0_2 = arith.constant 0 : index
    %c0_3 = arith.constant 0 : index
    %3 = vector.load %arg10[%c0_2, %c0_3] : memref<4x512xbf16, #tpu.memory_space<vmem>>, vector<4x128xbf16>
    tpu.vector_store %arg10[%c0_2, %c0_3], %2 {strides = array<i32>} : memref<4x512xbf16, #tpu.memory_space<vmem>>, vector<4x128xbf16>,
    %cst_4 = arith.constant 0.000000e+00 : bf16
    %4 = vector.broadcast %cst_4 : bf16 to vector<4x128xbf16>
    %c0_5 = arith.constant 0 : index
    %c384 = arith.constant 384 : index
    %5 = vector.load %arg10[%c0_5, %c384] : memref<4x512xbf16, #tpu.memory_space<vmem>>, vector<4x128xbf16>
    tpu.vector_store %arg10[%c0_5, %c384], %4 {strides = array<i32>} : memref<4x512xbf16, #tpu.memory_space<vmem>>, vector<4x128xbf16>,
    %c0_6 = arith.constant 0 : index
    %c0_7 = arith.constant 0 : index
    %c0_8 = arith.constant 0 : index
    %6 = vector.load %arg1[%c0_6, %c0_7, %c0_8] : memref<1x4x256xbf16, #tpu.memory_space<vmem>>, vector<1x4x256xbf16>
    %7 = vector.shape_cast %6 : vector<1x4x256xbf16> to vector<4x256xbf16>
    %c0_9 = arith.constant 0 : index
    %c128 = arith.constant 128 : index
    %8 = vector.load %arg10[%c0_9, %c128] : memref<4x512xbf16, #tpu.memory_space<vmem>>, vector<4x256xbf16>
    tpu.vector_store %arg10[%c0_9, %c128], %7 {strides = array<i32>} : memref<4x512xbf16, #tpu.memory_space<vmem>>, vector<4x256xbf16>,
    %c0_10 = arith.constant 0 : index
    %c0_11 = arith.constant 0 : index
    %9 = vector.load %arg2[%c0_10, %c0_11] : memref<16x36xbf16, #tpu.memory_space<vmem>>, vector<16x36xbf16>
    %c0_12 = arith.constant 0 : index
    %c111 = arith.constant 111 : index
    %10 = vector.load %arg10[%c0_12, %c111] : memref<4x512xbf16, #tpu.memory_space<vmem>>, vector<4x256xbf16>
    %11 = vector.broadcast %0 : vector<1x256xbf16> to vector<4x256xbf16>
    %12 = arith.mulf %10, %11 : vector<4x256xbf16>
    %c0_13 = arith.constant 0 : index
    %c112 = arith.constant 112 : index
    %13 = vector.load %arg10[%c0_13, %c112] : memref<4x512xbf16, #tpu.memory_space<vmem>>, vector<4x256xbf16>
    %c0_14 = arith.constant 0 : index
    %c113 = arith.constant 113 : index
    %14 = vector.load %arg10[%c0_14, %c113] : memref<4x512xbf16, #tpu.memory_space<vmem>>, vector<4x256xbf16>
    %15 = vector.broadcast %1 : vector<1x256xbf16> to vector<4x256xbf16>
    %16 = arith.mulf %14, %15 : vector<4x256xbf16>
    %c0_15 = arith.constant 0 : index
    %c127 = arith.constant 127 : index
    %17 = vector.load %arg10[%c0_15, %c127] : memref<4x512xbf16, #tpu.memory_space<vmem>>, vector<4x256xbf16>
    %18 = vector.broadcast %0 : vector<1x256xbf16> to vector<4x256xbf16>
    %19 = arith.mulf %17, %18 : vector<4x256xbf16>
    %c0_16 = arith.constant 0 : index
    %c128_17 = arith.constant 128 : index
    %20 = vector.load %arg10[%c0_16, %c128_17] : memref<4x512xbf16, #tpu.memory_space<vmem>>, vector<4x256xbf16>
    %c0_18 = arith.constant 0 : index
    %c129 = arith.constant 129 : index
    %21 = vector.load %arg10[%c0_18, %c129] : memref<4x512xbf16, #tpu.memory_space<vmem>>, vector<4x256xbf16>
    %22 = vector.broadcast %1 : vector<1x256xbf16> to vector<4x256xbf16>
    %23 = arith.mulf %21, %22 : vector<4x256xbf16>
    %c0_19 = arith.constant 0 : index
    %c143 = arith.constant 143 : index
    %24 = vector.load %arg10[%c0_19, %c143] : memref<4x512xbf16, #tpu.memory_space<vmem>>, vector<4x256xbf16>
    %25 = vector.broadcast %0 : vector<1x256xbf16> to vector<4x256xbf16>
    %26 = arith.mulf %24, %25 : vector<4x256xbf16>
    %c0_20 = arith.constant 0 : index
    %c144 = arith.constant 144 : index
    %27 = vector.load %arg10[%c0_20, %c144] : memref<4x512xbf16, #tpu.memory_space<vmem>>, vector<4x256xbf16>
    %c0_21 = arith.constant 0 : index
    %c145 = arith.constant 145 : index
    %28 = vector.load %arg10[%c0_21, %c145] : memref<4x512xbf16, #tpu.memory_space<vmem>>, vector<4x256xbf16>
    %29 = vector.broadcast %1 : vector<1x256xbf16> to vector<4x256xbf16>
    %30 = arith.mulf %28, %29 : vector<4x256xbf16>
    %31 = tpu.concatenate %12, %13, %16, %19, %20, %23, %26, %27, %30 in 0 : vector<4x256xbf16>, vector<4x256xbf16>, vector<4x256xbf16>, vector<4x256xbf16>, vector<4x256xbf16>, vector<4x256xbf16>, vector<4x256xbf16>, vector<4x256xbf16>, vector<4x256xbf16> -> vector<36x256xbf16>
    %cst_22 = arith.constant dense<0.000000e+00> : vector<16x256xf32>
    %32 = tpu.matmul %9, %31, %cst_22 {dimension_numbers = #tpu.dot_dimension_numbers<[1], [0], [0], [1], [0, 0, 1, 1], [], []>} : vector<16x36xbf16>, vector<36x256xbf16>, vector<16x256xf32> -> vector<16x256xf32>
    %33 = vector.extract_strided_slice %32 {offsets = [0, 0], sizes = [8, 256], strides = [1, 1]} : vector<16x256xf32> to vector<8x256xf32>
    %c0_23 = arith.constant 0 : index
    %c0_24 = arith.constant 0 : index
    %34 = vector.load %arg5[%c0_23, %c0_24] : memref<8x4xf32, #tpu.memory_space<vmem>>, vector<8x1xf32>
    %35 = vector.broadcast %34 : vector<8x1xf32> to vector<8x256xf32>
    %36 = arith.addf %33, %35 : vector<8x256xf32>
    %cst_25 = arith.constant 0.000000e+00 : f32
    %37 = vector.broadcast %cst_25 : f32 to vector<8x256xf32>
    %38 = arith.maximumf %36, %37 : vector<8x256xf32>
    %39 = vector.extract_strided_slice %32 {offsets = [8, 0], sizes = [8, 256], strides = [1, 1]} : vector<16x256xf32> to vector<8x256xf32>
    %c0_26 = arith.constant 0 : index
    %c2 = arith.constant 2 : index
    %40 = vector.load %arg5[%c0_26, %c2] : memref<8x4xf32, #tpu.memory_space<vmem>>, vector<8x1xf32>
    %41 = vector.broadcast %40 : vector<8x1xf32> to vector<8x256xf32>
    %42 = arith.addf %39, %41 : vector<8x256xf32>
    %cst_27 = arith.constant 0.000000e+00 : bf16
    %43 = vector.broadcast %cst_27 : bf16 to vector<8x128xbf16>
    %c0_28 = arith.constant 0 : index
    %c0_29 = arith.constant 0 : index
    %44 = vector.load %arg11[%c0_28, %c0_29] : memref<8x512xbf16, #tpu.memory_space<vmem>>, vector<8x128xbf16>
    tpu.vector_store %arg11[%c0_28, %c0_29], %43 {strides = array<i32>} : memref<8x512xbf16, #tpu.memory_space<vmem>>, vector<8x128xbf16>,
    %cst_30 = arith.constant 0.000000e+00 : bf16
    %45 = vector.broadcast %cst_30 : bf16 to vector<8x128xbf16>
    %c0_31 = arith.constant 0 : index
    %c384_32 = arith.constant 384 : index
    %46 = vector.load %arg11[%c0_31, %c384_32] : memref<8x512xbf16, #tpu.memory_space<vmem>>, vector<8x128xbf16>
    tpu.vector_store %arg11[%c0_31, %c384_32], %45 {strides = array<i32>} : memref<8x512xbf16, #tpu.memory_space<vmem>>, vector<8x128xbf16>,
    %47 = arith.truncf %38 : vector<8x256xf32> to vector<8x256xbf16>
    %c0_33 = arith.constant 0 : index
    %c128_34 = arith.constant 128 : index
    %48 = vector.load %arg11[%c0_33, %c128_34] : memref<8x512xbf16, #tpu.memory_space<vmem>>, vector<8x256xbf16>
    tpu.vector_store %arg11[%c0_33, %c128_34], %47 {strides = array<i32>} : memref<8x512xbf16, #tpu.memory_space<vmem>>, vector<8x256xbf16>,
    %c0_35 = arith.constant 0 : index
    %c0_36 = arith.constant 0 : index
    %49 = vector.load %arg3[%c0_35, %c0_36] : memref<8x72xbf16, #tpu.memory_space<vmem>>, vector<8x72xbf16>
    %c0_37 = arith.constant 0 : index
    %c111_38 = arith.constant 111 : index
    %50 = vector.load %arg11[%c0_37, %c111_38] : memref<8x512xbf16, #tpu.memory_space<vmem>>, vector<8x256xbf16>
    %51 = vector.broadcast %0 : vector<1x256xbf16> to vector<8x256xbf16>
    %52 = arith.mulf %50, %51 : vector<8x256xbf16>
    %c0_39 = arith.constant 0 : index
    %c112_40 = arith.constant 112 : index
    %53 = vector.load %arg11[%c0_39, %c112_40] : memref<8x512xbf16, #tpu.memory_space<vmem>>, vector<8x256xbf16>
    %c0_41 = arith.constant 0 : index
    %c113_42 = arith.constant 113 : index
    %54 = vector.load %arg11[%c0_41, %c113_42] : memref<8x512xbf16, #tpu.memory_space<vmem>>, vector<8x256xbf16>
    %55 = vector.broadcast %1 : vector<1x256xbf16> to vector<8x256xbf16>
    %56 = arith.mulf %54, %55 : vector<8x256xbf16>
    %c0_43 = arith.constant 0 : index
    %c127_44 = arith.constant 127 : index
    %57 = vector.load %arg11[%c0_43, %c127_44] : memref<8x512xbf16, #tpu.memory_space<vmem>>, vector<8x256xbf16>
    %58 = vector.broadcast %0 : vector<1x256xbf16> to vector<8x256xbf16>
    %59 = arith.mulf %57, %58 : vector<8x256xbf16>
    %c0_45 = arith.constant 0 : index
    %c128_46 = arith.constant 128 : index
    %60 = vector.load %arg11[%c0_45, %c128_46] : memref<8x512xbf16, #tpu.memory_space<vmem>>, vector<8x256xbf16>
    %c0_47 = arith.constant 0 : index
    %c129_48 = arith.constant 129 : index
    %61 = vector.load %arg11[%c0_47, %c129_48] : memref<8x512xbf16, #tpu.memory_space<vmem>>, vector<8x256xbf16>
    %62 = vector.broadcast %1 : vector<1x256xbf16> to vector<8x256xbf16>
    %63 = arith.mulf %61, %62 : vector<8x256xbf16>
    %c0_49 = arith.constant 0 : index
    %c143_50 = arith.constant 143 : index
    %64 = vector.load %arg11[%c0_49, %c143_50] : memref<8x512xbf16, #tpu.memory_space<vmem>>, vector<8x256xbf16>
    %65 = vector.broadcast %0 : vector<1x256xbf16> to vector<8x256xbf16>
    %66 = arith.mulf %64, %65 : vector<8x256xbf16>
    %c0_51 = arith.constant 0 : index
    %c144_52 = arith.constant 144 : index
    %67 = vector.load %arg11[%c0_51, %c144_52] : memref<8x512xbf16, #tpu.memory_space<vmem>>, vector<8x256xbf16>
    %c0_53 = arith.constant 0 : index
    %c145_54 = arith.constant 145 : index
    %68 = vector.load %arg11[%c0_53, %c145_54] : memref<8x512xbf16, #tpu.memory_space<vmem>>, vector<8x256xbf16>
    %69 = vector.broadcast %1 : vector<1x256xbf16> to vector<8x256xbf16>
    %70 = arith.mulf %68, %69 : vector<8x256xbf16>
    %71 = tpu.concatenate %52, %53, %56, %59, %60, %63, %66, %67, %70 in 0 : vector<8x256xbf16>, vector<8x256xbf16>, vector<8x256xbf16>, vector<8x256xbf16>, vector<8x256xbf16>, vector<8x256xbf16>, vector<8x256xbf16>, vector<8x256xbf16>, vector<8x256xbf16> -> vector<72x256xbf16>
    %cst_55 = arith.constant dense<0.000000e+00> : vector<8x256xf32>
    %72 = tpu.matmul %49, %71, %cst_55 {dimension_numbers = #tpu.dot_dimension_numbers<[1], [0], [0], [1], [0, 0, 1, 1], [], []>} : vector<8x72xbf16>, vector<72x256xbf16>, vector<8x256xf32> -> vector<8x256xf32>
    %c0_56 = arith.constant 0 : index
    %c1_57 = arith.constant 1 : index
    %73 = vector.load %arg5[%c0_56, %c1_57] : memref<8x4xf32, #tpu.memory_space<vmem>>, vector<8x1xf32>
    %74 = vector.broadcast %73 : vector<8x1xf32> to vector<8x256xf32>
    %75 = arith.addf %72, %74 : vector<8x256xf32>
    %cst_58 = arith.constant dense<0.000000e+00> : vector<8xf32>
    %76 = vector.multi_reduction <add>, %75, %cst_58 [1] : vector<8x256xf32> to vector<8xf32>
    %77 = vector.shape_cast %76 : vector<8xf32> to vector<8x1xf32>
    %cst_59 = arith.constant 2.560000e+02 : f32
    %78 = vector.broadcast %cst_59 : f32 to vector<8x1xf32>
    %79 = arith.divf %77, %78 : vector<8x1xf32>
    %c0_60 = arith.constant 0 : index
    %c0_61 = arith.constant 0 : index
    %80 = vector.load %arg6[%c0_60, %c0_61] : memref<8x2xf32, #tpu.memory_space<vmem>>, vector<8x2xf32>
    %81 = vector.broadcast %79 : vector<8x1xf32> to vector<8x2xf32>
    %82 = arith.mulf %80, %81 : vector<8x2xf32>
    %cst_62 = arith.constant dense<0.000000e+00> : vector<2xf32>
    %83 = vector.multi_reduction <add>, %82, %cst_62 [0] : vector<8x2xf32> to vector<2xf32>
    %84 = vector.shape_cast %83 : vector<2xf32> to vector<1x2xf32>
    %c0_63 = arith.constant 0 : index
    %c0_64 = arith.constant 0 : index
    %85 = vector.load %arg7[%c0_63, %c0_64] : memref<1x2xf32, #tpu.memory_space<vmem>>, vector<1x2xf32>
    %86 = arith.addf %84, %85 : vector<1x2xf32>
    %cst_65 = arith.constant 0.000000e+00 : f32
    %87 = vector.broadcast %cst_65 : f32 to vector<1x2xf32>
    %88 = arith.maximumf %86, %87 : vector<1x2xf32>
    %c0_66 = arith.constant 0 : index
    %c0_67 = arith.constant 0 : index
    %89 = vector.load %arg8[%c0_66, %c0_67] : memref<8x2xf32, #tpu.memory_space<vmem>>, vector<8x2xf32>
    %90 = vector.broadcast %88 : vector<1x2xf32> to vector<8x2xf32>
    %91 = arith.mulf %89, %90 : vector<8x2xf32>
    %cst_68 = arith.constant dense<0.000000e+00> : vector<8xf32>
    %92 = vector.multi_reduction <add>, %91, %cst_68 [1] : vector<8x2xf32> to vector<8xf32>
    %93 = vector.shape_cast %92 : vector<8xf32> to vector<8x1xf32>
    %c0_69 = arith.constant 0 : index
    %c3 = arith.constant 3 : index
    %94 = vector.load %arg5[%c0_69, %c3] : memref<8x4xf32, #tpu.memory_space<vmem>>, vector<8x1xf32>
    %95 = arith.addf %93, %94 : vector<8x1xf32>
    %96 = arith.negf %95 : vector<8x1xf32>
    %97 = math.exp %96 : vector<8x1xf32>
    %cst_70 = arith.constant 1.000000e+00 : f32
    %98 = vector.broadcast %cst_70 : f32 to vector<8x1xf32>
    %99 = arith.addf %98, %97 : vector<8x1xf32>
    %100 = arith.divf %98, %99 : vector<8x1xf32>
    %101 = vector.broadcast %100 : vector<8x1xf32> to vector<8x256xf32>
    %102 = arith.mulf %75, %101 : vector<8x256xf32>
    %103 = arith.addf %102, %42 : vector<8x256xf32>
    %cst_71 = arith.constant 0.000000e+00 : f32
    %104 = vector.broadcast %cst_71 : f32 to vector<8x256xf32>
    %105 = arith.maximumf %103, %104 : vector<8x256xf32>
    %c0_72 = arith.constant 0 : index
    %c0_73 = arith.constant 0 : index
    %c0_74 = arith.constant 0 : index
    %106 = vector.load %arg9[%c0_72, %c0_73, %c0_74] : memref<1x8x256xf32, #tpu.memory_space<vmem>>, vector<1x8x256xf32>
    %107 = vector.shape_cast %106 : vector<1x8x256xf32> to vector<8x256xf32>
    %108 = vector.shape_cast %105 : vector<8x256xf32> to vector<1x8x256xf32>
    tpu.vector_store %arg9[%c0_72, %c0_73, %c0_74], %108 {strides = array<i32>} : memref<1x8x256xf32, #tpu.memory_space<vmem>>, vector<1x8x256xf32>,
    return
  }
  func.func @transform_0(%arg0: i32) -> (i32, i32, i32) {
    %c0_i32 = arith.constant 0 : i32
    %c0_i32_0 = arith.constant 0 : i32
    %c0_i32_1 = arith.constant 0 : i32
    return %arg0, %c0_i32, %c0_i32_0 : i32, i32, i32
  }
  func.func @transform_1(%arg0: i32) -> (i32, i32) {
    %c0_i32 = arith.constant 0 : i32
    %c0_i32_0 = arith.constant 0 : i32
    %c0_i32_1 = arith.constant 0 : i32
    return %c0_i32, %c0_i32_0 : i32, i32
  }
  func.func @transform_2(%arg0: i32) -> (i32, i32) {
    %c0_i32 = arith.constant 0 : i32
    %c0_i32_0 = arith.constant 0 : i32
    %c0_i32_1 = arith.constant 0 : i32
    return %c0_i32, %c0_i32_0 : i32, i32
  }
  func.func @transform_3(%arg0: i32) -> (i32, i32) {
    %c0_i32 = arith.constant 0 : i32
    %c0_i32_0 = arith.constant 0 : i32
    %c0_i32_1 = arith.constant 0 : i32
    return %c0_i32, %c0_i32_0 : i32, i32
  }
  func.func @transform_4(%arg0: i32) -> (i32, i32) {
    %c0_i32 = arith.constant 0 : i32
    %c0_i32_0 = arith.constant 0 : i32
    %c0_i32_1 = arith.constant 0 : i32
    return %c0_i32, %c0_i32_0 : i32, i32
  }
  func.func @transform_5(%arg0: i32) -> (i32, i32) {
    %c0_i32 = arith.constant 0 : i32
    %c0_i32_0 = arith.constant 0 : i32
    %c0_i32_1 = arith.constant 0 : i32
    return %c0_i32, %c0_i32_0 : i32, i32
  }
  func.func @transform_6(%arg0: i32) -> (i32, i32) {
    %c0_i32 = arith.constant 0 : i32
    %c0_i32_0 = arith.constant 0 : i32
    %c0_i32_1 = arith.constant 0 : i32
    return %c0_i32, %c0_i32_0 : i32, i32
  }
  func.func @transform_7(%arg0: i32) -> (i32, i32) {
    %c0_i32 = arith.constant 0 : i32
    %c0_i32_0 = arith.constant 0 : i32
    %c0_i32_1 = arith.constant 0 : i32
    return %c0_i32, %c0_i32_0 : i32, i32
  }
  func.func @transform_8(%arg0: i32) -> (i32, i32, i32) {
    %c0_i32 = arith.constant 0 : i32
    %c0_i32_0 = arith.constant 0 : i32
    %c0_i32_1 = arith.constant 0 : i32
    return %arg0, %c0_i32, %c0_i32_0 : i32, i32, i32
  }
}

</mosaic_0001>

<llo_original>
// kernel: tpu_custom_call.1
$region0: #{tpu_custom_call.1}
  #allocation0 [shape = 'u32[]', space=smem, size = 0x4, offset = 0x4, fixed_abs, tag = 'smem constant byte address 0x4 - core index']
  #allocation1 [shape = 'u32[144,128]{1,0:T(1,128)}', space=vmem, size = 0x12000, scoped, tag = 'internal scratch']
  #allocation2 [shape = 'bf16[4,512]{1,0:T(4,128)(2,1)}', space=vmem, size = 0x1000, scoped, tag = 'scratch operand']
  #allocation3 [shape = 'bf16[8,512]{1,0:T(8,128)(2,1)}', space=vmem, size = 0x2000, scoped, tag = 'scratch operand']
  %s0 = inlined_call_operand.vmem [shape: bf16[2,4,256], index: 0, kind: input, shape index: {}]
  %s1 = inlined_call_operand.vmem [shape: bf16[16,36], index: 1, kind: input, shape index: {}]
  %s2 = inlined_call_operand.vmem [shape: bf16[8,72], index: 2, kind: input, shape index: {}]
  %s3 = inlined_call_operand.vmem [shape: bf16[2,256], index: 3, kind: input, shape index: {}]
  %s4 = inlined_call_operand.vmem [shape: f32[8,4], index: 4, kind: input, shape index: {}]
  %s5 = inlined_call_operand.vmem [shape: f32[8,2], index: 5, kind: input, shape index: {}]
  %s6 = inlined_call_operand.vmem [shape: f32[1,2], index: 6, kind: input, shape index: {}]
  %s7 = inlined_call_operand.vmem [shape: f32[8,2], index: 7, kind: input, shape index: {}]
  %s8 = inlined_call_operand.hbm [shape: f32[2,8,256], index: 8, kind: output, shape index: {}]
  %s9 = sld [smem:[#allocation0]]
  $region65: #{tpu_custom_call.1} parent=0
    _
  %s11 = ssub.s32 1, %s9
  %s12 = scalar_select 0, %s11, %s9
  $region1: #{tpu_custom_call.1} parent=0
    #allocation4 [shape = 'u8[16384]{0}', space=vmem, size = 0x4000, scoped, tag = 'output window, operand 0']
    #allocation5 [shape = 's32[2]{0}', space=sflag, size = 0x8, scoped, tag = 'scoped memory for tpu_custom_call.1']
    %13 = vsyncpa [#allocation5], 0
    %s14 = scalar_lea.sflag [#allocation5], 1
    %15 = vsyncpa %s14, 0
    loop: start=0, step=1, limit=4
    $region2: #{tpu_custom_call.1} parent=1 // loop_pre_header
      _
    $region3: #{tpu_custom_call.1} parent=1 // loop_header
      %s17 = sphi 0, %s21
      %p18 = scmp.ge.s32.totalorder %s17, 4
      %s27 = sphi 0, %s29
      %s30 = sphi 0, %s27
      %s31 = sphi 0, %s30
      %s47 = sphi 0, %s31
      %s51 = sphi 0, %s51
      %s53 = sphi 0, %s51
      %s54 = sphi 0, %s53
      %s68 = sphi 0, %s54
      %s72 = sphi 0, %s72
      %s74 = sphi 0, %s72
      %s75 = sphi 0, %s74
      %s89 = sphi 0, %s75
      %s93 = sphi 0, %s93
      %s95 = sphi 0, %s93
      %s96 = sphi 0, %s95
      %s110 = sphi 0, %s96
      %s114 = sphi 0, %s114
      %s116 = sphi 0, %s114
      %s117 = sphi 0, %s116
      %s131 = sphi 0, %s117
      %s135 = sphi 0, %s135
      %s137 = sphi 0, %s135
      %s138 = sphi 0, %s137
      %s152 = sphi 0, %s138
      %s156 = sphi 0, %s156
      %s158 = sphi 0, %s156
      %s159 = sphi 0, %s158
      %s173 = sphi 0, %s159
      %s177 = sphi 0, %s177
      %s179 = sphi 0, %s177
      %s180 = sphi 0, %s179
      %s194 = sphi 0, %s180
      %s200 = sphi 0, %s202
      %s203 = sphi 0, %s200
      %s204 = sphi 0, %s203
      %s220 = sphi 0, %s204
    $region4: #{tpu_custom_call.1} parent=1 // loop_header_branch
      %20 = sbr.rel (%p18) target = $region8
    $region5: #{tpu_custom_call.1} parent=1 // loop_body
      %s22 = ssub.s32 %s17, 1
      %s23 = ssub.s32 %s17, 2
      %s24 = sadd.s32 %s17, 1
      %s25 = ssub.s32 %s17, %s24
      %p26 = scmp.eq.s32.totalorder %s25, 0
      %s28 = sadd.s32 %s27, 1
      %s29 = scalar_select %p26, %s27, %s28
      %p32 = pneg %p26
      %p33 = scmp.eq.s32.totalorder %s17, 1
      %p34 = por %p32, %p33
      %p35 = scmp.ne.s32.totalorder %s27, %s30
      %p36 = scmp.eq.s32.totalorder %s17, 0
      %p37 = por %p35, %p36
      %p38 = scmp.ne.s32.totalorder %s27, %s30
      %p39 = scmp.eq.s32.totalorder %s22, 1
      %p40 = por %p38, %p39
      %p41 = scmp.ne.s32.totalorder %s30, %s31
      %p42 = scmp.eq.s32.totalorder %s22, 0
      %p43 = por %p41, %p42
      %p44 = scmp.ne.s32.totalorder %s30, %s31
      %p45 = scmp.eq.s32.totalorder %s23, 1
      %p46 = por %p44, %p45
      %p48 = scmp.ne.s32.totalorder %s31, %s47
      %p49 = scmp.eq.s32.totalorder %s23, 0
      %p50 = por %p48, %p49
      %s52 = sadd.s32 %s51, 1
      %p55 = scmp.eq.s32.totalorder %s17, 1
      %p56 = scmp.ne.s32.totalorder %s51, %s53
      %p57 = scmp.eq.s32.totalorder %s17, 0
      %p58 = por %p56, %p57
      %p59 = scmp.ne.s32.totalorder %s51, %s53
      %p60 = scmp.eq.s32.totalorder %s22, 1
      %p61 = por %p59, %p60
      %p62 = scmp.ne.s32.totalorder %s53, %s54
      %p63 = scmp.eq.s32.totalorder %s22, 0
      %p64 = por %p62, %p63
      %p65 = scmp.ne.s32.totalorder %s53, %s54
      %p66 = scmp.eq.s32.totalorder %s23, 1
      %p67 = por %p65, %p66
      %p69 = scmp.ne.s32.totalorder %s54, %s68
      %p70 = scmp.eq.s32.totalorder %s23, 0
      %p71 = por %p69, %p70
      %s73 = sadd.s32 %s72, 1
      %p76 = scmp.eq.s32.totalorder %s17, 1
      %p77 = scmp.ne.s32.totalorder %s72, %s74
      %p78 = scmp.eq.s32.totalorder %s17, 0
      %p79 = por %p77, %p78
      %p80 = scmp.ne.s32.totalorder %s72, %s74
      %p81 = scmp.eq.s32.totalorder %s22, 1
      %p82 = por %p80, %p81
      %p83 = scmp.ne.s32.totalorder %s74, %s75
      %p84 = scmp.eq.s32.totalorder %s22, 0
      %p85 = por %p83, %p84
      %p86 = scmp.ne.s32.totalorder %s74, %s75
      %p87 = scmp.eq.s32.totalorder %s23, 1
      %p88 = por %p86, %p87
      %p90 = scmp.ne.s32.totalorder %s75, %s89
      %p91 = scmp.eq.s32.totalorder %s23, 0
      %p92 = por %p90, %p91
      %s94 = sadd.s32 %s93, 1
      %p97 = scmp.eq.s32.totalorder %s17, 1
      %p98 = scmp.ne.s32.totalorder %s93, %s95
      %p99 = scmp.eq.s32.totalorder %s17, 0
      %p100 = por %p98, %p99
      %p101 = scmp.ne.s32.totalorder %s93, %s95
      %p102 = scmp.eq.s32.totalorder %s22, 1
      %p103 = por %p101, %p102
      %p104 = scmp.ne.s32.totalorder %s95, %s96
      %p105 = scmp.eq.s32.totalorder %s22, 0
      %p106 = por %p104, %p105
      %p107 = scmp.ne.s32.totalorder %s95, %s96
      %p108 = scmp.eq.s32.totalorder %s23, 1
      %p109 = por %p107, %p108
      %p111 = scmp.ne.s32.totalorder %s96, %s110
      %p112 = scmp.eq.s32.totalorder %s23, 0
      %p113 = por %p111, %p112
      %s115 = sadd.s32 %s114, 1
      %p118 = scmp.eq.s32.totalorder %s17, 1
      %p119 = scmp.ne.s32.totalorder %s114, %s116
      %p120 = scmp.eq.s32.totalorder %s17, 0
      %p121 = por %p119, %p120
      %p122 = scmp.ne.s32.totalorder %s114, %s116
      %p123 = scmp.eq.s32.totalorder %s22, 1
      %p124 = por %p122, %p123
      %p125 = scmp.ne.s32.totalorder %s116, %s117
      %p126 = scmp.eq.s32.totalorder %s22, 0
      %p127 = por %p125, %p126
      %p128 = scmp.ne.s32.totalorder %s116, %s117
      %p129 = scmp.eq.s32.totalorder %s23, 1
      %p130 = por %p128, %p129
      %p132 = scmp.ne.s32.totalorder %s117, %s131
      %p133 = scmp.eq.s32.totalorder %s23, 0
      %p134 = por %p132, %p133
      %s136 = sadd.s32 %s135, 1
      %p139 = scmp.eq.s32.totalorder %s17, 1
      %p140 = scmp.ne.s32.totalorder %s135, %s137
      %p141 = scmp.eq.s32.totalorder %s17, 0
      %p142 = por %p140, %p141
      %p143 = scmp.ne.s32.totalorder %s135, %s137
      %p144 = scmp.eq.s32.totalorder %s22, 1
      %p145 = por %p143, %p144
      %p146 = scmp.ne.s32.totalorder %s137, %s138
      %p147 = scmp.eq.s32.totalorder %s22, 0
      %p148 = por %p146, %p147
      %p149 = scmp.ne.s32.totalorder %s137, %s138
      %p150 = scmp.eq.s32.totalorder %s23, 1
      %p151 = por %p149, %p150
      %p153 = scmp.ne.s32.totalorder %s138, %s152
      %p154 = scmp.eq.s32.totalorder %s23, 0
      %p155 = por %p153, %p154
      %s157 = sadd.s32 %s156, 1
      %p160 = scmp.eq.s32.totalorder %s17, 1
      %p161 = scmp.ne.s32.totalorder %s156, %s158
      %p162 = scmp.eq.s32.totalorder %s17, 0
      %p163 = por %p161, %p162
      %p164 = scmp.ne.s32.totalorder %s156, %s158
      %p165 = scmp.eq.s32.totalorder %s22, 1
      %p166 = por %p164, %p165
      %p167 = scmp.ne.s32.totalorder %s158, %s159
      %p168 = scmp.eq.s32.totalorder %s22, 0
      %p169 = por %p167, %p168
      %p170 = scmp.ne.s32.totalorder %s158, %s159
      %p171 = scmp.eq.s32.totalorder %s23, 1
      %p172 = por %p170, %p171
      %p174 = scmp.ne.s32.totalorder %s159, %s173
      %p175 = scmp.eq.s32.totalorder %s23, 0
      %p176 = por %p174, %p175
      %s178 = sadd.s32 %s177, 1
      %p181 = scmp.eq.s32.totalorder %s17, 1
      %p182 = scmp.ne.s32.totalorder %s177, %s179
      %p183 = scmp.eq.s32.totalorder %s17, 0
      %p184 = por %p182, %p183
      %p185 = scmp.ne.s32.totalorder %s177, %s179
      %p186 = scmp.eq.s32.totalorder %s22, 1
      %p187 = por %p185, %p186
      %p188 = scmp.ne.s32.totalorder %s179, %s180
      %p189 = scmp.eq.s32.totalorder %s22, 0
      %p190 = por %p188, %p189
      %p191 = scmp.ne.s32.totalorder %s179, %s180
      %p192 = scmp.eq.s32.totalorder %s23, 1
      %p193 = por %p191, %p192
      %p195 = scmp.ne.s32.totalorder %s180, %s194
      %p196 = scmp.eq.s32.totalorder %s23, 0
      %p197 = por %p195, %p196
      %s198 = ssub.s32 %s17, %s24
      %p199 = scmp.eq.s32.totalorder %s198, 0
      %s201 = sadd.s32 %s200, 1
      %s202 = scalar_select %p199, %s200, %s201
      %p205 = pneg %p199
      %p206 = scmp.eq.s32.totalorder %s17, 1
      %p207 = por %p205, %p206
      %p208 = scmp.ne.s32.totalorder %s200, %s203
      %p209 = scmp.eq.s32.totalorder %s17, 0
      %p210 = por %p208, %p209
      %p211 = scmp.ne.s32.totalorder %s200, %s203
      %p212 = scmp.eq.s32.totalorder %s22, 1
      %p213 = por %p211, %p212
      %p214 = scmp.ne.s32.totalorder %s203, %s204
      %p215 = scmp.eq.s32.totalorder %s22, 0
      %p216 = por %p214, %p215
      %p217 = scmp.ne.s32.totalorder %s203, %s204
      %p218 = scmp.eq.s32.totalorder %s23, 1
      %p219 = por %p217, %p218
      %p221 = scmp.ne.s32.totalorder %s204, %s220
      %p222 = scmp.eq.s32.totalorder %s23, 0
      %p223 = por %p221, %p222
      %p224 = scmp.le.s32.totalorder 1, %s17
      %p225 = scmp.lt.s32.totalorder %s17, 3
      %p226 = pnand %p224, %p225
      %p227 = pneg %p226
      // Predicated region
      $region9: #{tpu_custom_call.1} parent=5 // pred_check
        _
      $region10: #{tpu_custom_call.1} parent=5 // pred_check_branch
        %229 = sbr.rel (%p226) target = $region12
      $region11: #{tpu_custom_call.1} parent=5 // pred_region
        %s230 = ssub.s32 %s17, 1
        // Predicated region
        $region13: #{tpu_custom_call.1} parent=11 // pred_check
          %p231 = pneg %p64
        $region14: #{tpu_custom_call.1} parent=11 // pred_check_branch
          %233 = sbr.rel (%p231) target = $region16
        $region15: #{tpu_custom_call.1} parent=11 // pred_region
          _
        $region16: #{tpu_custom_call.1} parent=11 // pred_fallthru
          _
        // Predicated region
        $region17: #{tpu_custom_call.1} parent=11 // pred_check
          %p234 = pneg %p85
        $region18: #{tpu_custom_call.1} parent=11 // pred_check_branch
          %236 = sbr.rel (%p234) target = $region20
        $region19: #{tpu_custom_call.1} parent=11 // pred_region
          _
        $region20: #{tpu_custom_call.1} parent=11 // pred_fallthru
          _
        // Predicated region
        $region21: #{tpu_custom_call.1} parent=11 // pred_check
          %p237 = pneg %p106
        $region22: #{tpu_custom_call.1} parent=11 // pred_check_branch
          %239 = sbr.rel (%p237) target = $region24
        $region23: #{tpu_custom_call.1} parent=11 // pred_region
          _
        $region24: #{tpu_custom_call.1} parent=11 // pred_fallthru
          _
        // Predicated region
        $region25: #{tpu_custom_call.1} parent=11 // pred_check
          %p240 = pneg %p127
        $region26: #{tpu_custom_call.1} parent=11 // pred_check_branch
          %242 = sbr.rel (%p240) target = $region28
        $region27: #{tpu_custom_call.1} parent=11 // pred_region
          _
        $region28: #{tpu_custom_call.1} parent=11 // pred_fallthru
          _
        // Predicated region
        $region29: #{tpu_custom_call.1} parent=11 // pred_check
          %p243 = pneg %p148
        $region30: #{tpu_custom_call.1} parent=11 // pred_check_branch
          %245 = sbr.rel (%p243) target = $region32
        $region31: #{tpu_custom_call.1} parent=11 // pred_region
          _
        $region32: #{tpu_custom_call.1} parent=11 // pred_fallthru
          _
        // Predicated region
        $region33: #{tpu_custom_call.1} parent=11 // pred_check
          %p246 = pneg %p169
        $region34: #{tpu_custom_call.1} parent=11 // pred_check_branch
          %248 = sbr.rel (%p246) target = $region36
        $region35: #{tpu_custom_call.1} parent=11 // pred_region
          _
        $region36: #{tpu_custom_call.1} parent=11 // pred_fallthru
          _
        // Predicated region
        $region37: #{tpu_custom_call.1} parent=11 // pred_check
          %p249 = pneg %p190
        $region38: #{tpu_custom_call.1} parent=11 // pred_check_branch
          %251 = sbr.rel (%p249) target = $region40
        $region39: #{tpu_custom_call.1} parent=11 // pred_region
          _
        $region40: #{tpu_custom_call.1} parent=11 // pred_fallthru
          _
      $region12: #{tpu_custom_call.1} parent=5 // pred_fallthru
        _
      %p252 = scmp.lt.s32.totalorder %s17, 2
      // Predicated region
      $region41: #{tpu_custom_call.1} parent=5 // pred_check
        %p253 = pneg %p252
      $region42: #{tpu_custom_call.1} parent=5 // pred_check_branch
        %255 = sbr.rel (%p253) target = $region44
      $region43: #{tpu_custom_call.1} parent=5 // pred_region
        // Predicated region
        $region45: #{tpu_custom_call.1} parent=43 // pred_check
          %p256 = pneg %p37
        $region46: #{tpu_custom_call.1} parent=43 // pred_check_branch
          %258 = sbr.rel (%p256) target = $region48
        $region47: #{tpu_custom_call.1} parent=43 // pred_region
          %p259 = scmp.lt.s32.totalorder %s17, 1
          %s260 = scalar_select %p259, %s17, 1
          %s261 = smul.addr %s260, 2
          %s262 = smul.addr %s261, 2
          %s263 = scalar_lea.vmem %s0, %s262
        $region48: #{tpu_custom_call.1} parent=43 // pred_fallthru
          _
      $region44: #{tpu_custom_call.1} parent=5 // pred_fallthru
        _
      %p264 = scmp.le.s32.totalorder 1, %s17
      %p265 = scmp.lt.s32.totalorder %s17, 3
      %p266 = pnand %p264, %p265
      %p267 = pneg %p266
      // Predicated region
      $region49: #{tpu_custom_call.1} parent=5 // pred_check
        _
      $region50: #{tpu_custom_call.1} parent=5 // pred_check_branch
        %269 = sbr.rel (%p266) target = $region52
      $region51: #{tpu_custom_call.1} parent=5 // pred_region
        %s270 = ssub.s32 %s17, 1
        %p271 = scmp.lt.s32.totalorder %s22, 1
        %s272 = scalar_select %p271, %s22, 1
        %s273 = smul.addr %s272, 2
        %s274 = smul.addr %s273, 2
        %s275 = scalar_lea.vmem %s0, %s274
        %p276 = pneg %p43
        %p277 = pneg %p40
        %p278 = pneg %p64
        %p279 = pneg %p61
        %p280 = pneg %p85
        %p281 = pneg %p82
        %p282 = pneg %p106
        %p283 = pneg %p103
        %p284 = pneg %p127
        %p285 = pneg %p124
        %p286 = pneg %p148
        %p287 = pneg %p145
        %p288 = pneg %p169
        %p289 = pneg %p166
        %p290 = pneg %p190
        %p291 = pneg %p187
        %p292 = pneg %p216
        %p293 = pneg %p213
        %s294 = sand.u32 %s203, 1
        %s295 = scalar_lea.sflag [#allocation5], %s294
        %s296 = sand.u32 %s203, 1
        %s297 = smul.addr %s296, 16
        %s298 = scalar_lea.vmem [#allocation4], %s297
        %p299 = scmp.lt.s32.totalorder %s22, 1
        %s300 = scalar_select %p299, %s22, 1
        %s301 = smul.addr %s300, 2
        %s302 = smul.addr %s301, 2
        %s303 = scalar_lea.vmem %s0, %s302
        %v305 = vld [vmem:[%s3] sm:$0x3]
        %306 = vst [vmem:[#allocation2] sm:$0x3] 0
        %307 = vst [vmem:[#allocation2 + $0x6] sm:$0x3] 0
        %v308 = vld [vmem:[%s303] sm:$0xf]
        %309 = vst [vmem:[#allocation2 + $0x2] sm:$0xf] %v308
        %v310 = vld [vmem:[%s1] sm:$0xf]
        %v311 = vld [vmem:[%s1 + $0x4] sm:$0xf]
        %v312 = vld [vmem:[#allocation2] sm:$0x3f]
        %v315 = vunpack.c.l.s4 1966171168
        %v316 = vunpack.c.0.s8 %v315
        %v317 = vlaneseq
        %v318 = vshrl.u32 %v317, 7
        %v319 = vsub.s32 %v316, %v318
        %v320 = vrot.slane %v305, %v319
        %v321 = vcombine.high %v320, %v320
        %v323 = vunpack.c.l.s4 1966171168
        %v324 = vunpack.c.0.s8 %v323
        %v325 = vlaneseq
        %v326 = vshrl.u32 %v325, 7
        %v327 = vsub.s32 %v324, %v326
        %v328 = vrot.slane %v320, %v327
        %v330 = vunpack.c.l.s4 1966171168
        %v331 = vunpack.c.0.s8 %v330
        %v332 = vlaneseq
        %v333 = vshrl.u32 %v332, 7
        %v334 = vsub.s32 %v331, %v333
        %v335 = vrot.slane %v321, %v334
        %v337 = vpack.i.b16 %v328, %v328
        %v339 = vlaneseq
        %v340 = vshrl.u32 %v339, 7
        %v341 = vsub.s32 0, %v340
        %v342 = vrot.slane %v337, %v341
        %v344 = vpack.i.b16 %v335, %v335
        %v346 = vlaneseq
        %v347 = vshrl.u32 %v346, 7
        %v348 = vsub.s32 0, %v347
        %v349 = vrot.slane %v344, %v348
        %v352 = vcombine.low %v342, %v349
        %v354 = vunpack.c.l.s4 1983009808
        %v355 = vunpack.c.0.s8 %v354
        %v356 = vlaneseq
        %v357 = vshrl.u32 %v356, 7
        %v358 = vsub.s32 %v355, %v357
        %v359 = vrot.slane %v352, %v358
        %360 = vrot.lane.b32.xlu0 %v359, 111
        %v361 = vpop.permute.xlu0 %360
        %v362 = vrot.slane %v361, 6
        %vm363 = vcmask 908288
        %v364 = vsel %vm363, %v362, %v361
        %v366 = vmul.bf16 %v312, %v364
        %v367 = vshrl.u32 %v328, 16
        %v368 = vpack.i.b16 %v367, %v367
        %v370 = vlaneseq
        %v371 = vshrl.u32 %v370, 7
        %v372 = vsub.s32 0, %v371
        %v373 = vrot.slane %v368, %v372
        %v374 = vshrl.u32 %v335, 16
        %v375 = vpack.i.b16 %v374, %v374
        %v377 = vlaneseq
        %v378 = vshrl.u32 %v377, 7
        %v379 = vsub.s32 0, %v378
        %v380 = vrot.slane %v375, %v379
        %v383 = vcombine.low %v373, %v380
        %v385 = vunpack.c.l.s4 1983009808
        %v386 = vunpack.c.0.s8 %v385
        %v387 = vlaneseq
        %v388 = vshrl.u32 %v387, 7
        %v389 = vsub.s32 %v386, %v388
        %v390 = vrot.slane %v383, %v389
        %391 = vrot.lane.b32.xlu0 %v390, 113
        %v392 = vpop.permute.xlu0 %391
        %v393 = vrot.slane %v392, 6
        %vm394 = vcmask 924672
        %v395 = vsel %vm394, %v393, %v392
        %v397 = vmul.bf16 %v312, %v395
        %398 = vrot.lane.b32.xlu0 %v359, 127
        %v399 = vpop.permute.xlu0 %398
        %v400 = vrot.slane %v399, 6
        %vm401 = vcmask 1039360
        %v402 = vsel %vm401, %v400, %v399
        %v404 = vmul.bf16 %v312, %v402
        %v405 = vld [vmem:[#allocation2 + $0x2] sm:$0xf]
        %v406 = vld [vmem:[#allocation2 + $0x2] sm:$0x3f]
        %407 = vrot.lane.b32.xlu0 %v390, 1
        %v408 = vpop.permute.xlu0 %407
        %v409 = vrot.slane %v408, 6
        %vm410 = vcmask 7168
        %v411 = vsel %vm410, %v409, %v408
        %v413 = vmul.bf16 %v406, %v411
        %414 = vrot.lane.b32.xlu0 %v359, 15
        %v415 = vpop.permute.xlu0 %414
        %v416 = vrot.slane %v415, 6
        %vm417 = vcmask 121856
        %v418 = vsel %vm417, %v416, %v415
        %v420 = vmul.bf16 %v406, %v418
        %421 = vrot.lane.b32.xlu0 %v390, 17
        %v422 = vpop.permute.xlu0 %421
        %v423 = vrot.slane %v422, 6
        %vm424 = vcmask 138240
        %v425 = vsel %vm424, %v423, %v422
        %v427 = vmul.bf16 %v406, %v425
        %v429 = vcombine.high %v366, %v366
        %v431 = vunpack.c.l.s4 1983009808
        %v432 = vunpack.c.0.s8 %v431
        %v433 = vlaneseq
        %v434 = vshrl.u32 %v433, 7
        %v435 = vsub.s32 %v432, %v434
        %v436 = vrot.slane %v366, %v435
        %v438 = vunpack.c.l.s4 1983009808
        %v439 = vunpack.c.0.s8 %v438
        %v440 = vlaneseq
        %v441 = vshrl.u32 %v440, 7
        %v442 = vsub.s32 %v439, %v441
        %v443 = vrot.slane %v429, %v442
        %v444 = vcombine.high %v436, %v436
        %v446 = vcombine.low %v312, %v312
        %v448 = vunpack.c.l.s4 1983009808
        %v449 = vunpack.c.0.s8 %v448
        %v450 = vlaneseq
        %v451 = vshrl.u32 %v450, 7
        %v452 = vsub.s32 %v449, %v451
        %v453 = vrot.slane %v446, %v452
        %v455 = vunpack.c.l.s4 1983009808
        %v456 = vunpack.c.0.s8 %v455
        %v457 = vlaneseq
        %v458 = vshrl.u32 %v457, 7
        %v459 = vsub.s32 %v456, %v458
        %v460 = vrot.slane %v312, %v459
        %v461 = vcombine.high %v453, %v453
        %462 = vrot.lane.b32.xlu0 %v453, 127
        %v463 = vpop.permute.xlu0 %462
        %464 = vrot.lane.b32.xlu0 %v461, 127
        %v465 = vpop.permute.xlu0 %464
        %466 = vrot.lane.b32.xlu0 %v460, 127
        %v467 = vpop.permute.xlu0 %466
        %v468 = vsel %vm401, %v463, %v465
        %v469 = vsel %vm401, %v465, %v467
        %v471 = vcombine.high %v397, %v397
        %v473 = vunpack.c.l.s4 1983009808
        %v474 = vunpack.c.0.s8 %v473
        %v475 = vlaneseq
        %v476 = vshrl.u32 %v475, 7
        %v477 = vsub.s32 %v474, %v476
        %v478 = vrot.slane %v397, %v477
        %v480 = vunpack.c.l.s4 1983009808
        %v481 = vunpack.c.0.s8 %v480
        %v482 = vlaneseq
        %v483 = vshrl.u32 %v482, 7
        %v484 = vsub.s32 %v481, %v483
        %v485 = vrot.slane %v471, %v484
        %v486 = vcombine.low %v478, %v478
        %v487 = vcombine.low %v485, %v485
        %488 = vrot.lane.b32.xlu0 %v486, 126
        %v489 = vpop.permute.xlu0 %488
        %490 = vrot.lane.b32.xlu0 %v478, 126
        %v491 = vpop.permute.xlu0 %490
        %492 = vrot.lane.b32.xlu0 %v487, 126
        %v493 = vpop.permute.xlu0 %492
        %vm494 = vcmask 1031168
        %v495 = vsel %vm494, %v489, %v491
        %v496 = vsel %vm494, %v491, %v493
        %v498 = vcombine.low %v404, %v404
        %v500 = vunpack.c.l.s4 1983009808
        %v501 = vunpack.c.0.s8 %v500
        %v502 = vlaneseq
        %v503 = vshrl.u32 %v502, 7
        %v504 = vsub.s32 %v501, %v503
        %v505 = vrot.slane %v498, %v504
        %v507 = vunpack.c.l.s4 1983009808
        %v508 = vunpack.c.0.s8 %v507
        %v509 = vlaneseq
        %v510 = vshrl.u32 %v509, 7
        %v511 = vsub.s32 %v508, %v510
        %v512 = vrot.slane %v404, %v511
        %v513 = vcombine.low %v505, %v505
        %v514 = vcombine.low %v512, %v512
        %515 = vrot.lane.b32.xlu0 %v513, 112
        %v516 = vpop.permute.xlu0 %515
        %517 = vrot.lane.b32.xlu0 %v505, 112
        %v518 = vpop.permute.xlu0 %517
        %519 = vrot.lane.b32.xlu0 %v514, 112
        %v520 = vpop.permute.xlu0 %519
        %vm521 = vcmask 916480
        %v522 = vsel %vm521, %v516, %v518
        %v523 = vsel %vm521, %v518, %v520
        %v526 = vunpack.c.l.s4 1983009808
        %v527 = vunpack.c.0.s8 %v526
        %v528 = vlaneseq
        %v529 = vshrl.u32 %v528, 7
        %v530 = vsub.s32 %v527, %v529
        %v531 = vrot.slane %v405, %v530
        %v532 = vcombine.high %v531, %v531
        %533 = vrot.lane.b32.xlu0 %v531, 111
        %v534 = vpop.permute.xlu0 %533
        %535 = vrot.lane.b32.xlu0 %v532, 111
        %v536 = vpop.permute.xlu0 %535
        %v537 = vsel %vm363, %v534, %v536
        %v539 = vcombine.low %v413, %v413
        %v541 = vunpack.c.l.s4 1983009808
        %v542 = vunpack.c.0.s8 %v541
        %v543 = vlaneseq
        %v544 = vshrl.u32 %v543, 7
        %v545 = vsub.s32 %v542, %v544
        %v546 = vrot.slane %v539, %v545
        %v548 = vunpack.c.l.s4 1983009808
        %v549 = vunpack.c.0.s8 %v548
        %v550 = vlaneseq
        %v551 = vshrl.u32 %v550, 7
        %v552 = vsub.s32 %v549, %v551
        %v553 = vrot.slane %v413, %v552
        %v554 = vcombine.high %v546, %v546
        %555 = vrot.lane.b32.xlu0 %v546, 110
        %v556 = vpop.permute.xlu0 %555
        %557 = vrot.lane.b32.xlu0 %v554, 110
        %v558 = vpop.permute.xlu0 %557
        %559 = vrot.lane.b32.xlu0 %v553, 110
        %v560 = vpop.permute.xlu0 %559
        %vm561 = vcmask 900096
        %v562 = vsel %vm561, %v556, %v558
        %v563 = vsel %vm561, %v558, %v560
        %v565 = vcombine.high %v420, %v420
        %v567 = vunpack.c.l.s4 1983009808
        %v568 = vunpack.c.0.s8 %v567
        %v569 = vlaneseq
        %v570 = vshrl.u32 %v569, 7
        %v571 = vsub.s32 %v568, %v570
        %v572 = vrot.slane %v420, %v571
        %v574 = vunpack.c.l.s4 1983009808
        %v575 = vunpack.c.0.s8 %v574
        %v576 = vlaneseq
        %v577 = vshrl.u32 %v576, 7
        %v578 = vsub.s32 %v575, %v577
        %v579 = vrot.slane %v565, %v578
        %v580 = vcombine.low %v572, %v572
        %v581 = vcombine.low %v579, %v579
        %582 = vrot.lane.b32.xlu0 %v580, 96
        %v583 = vpop.permute.xlu0 %582
        %584 = vrot.lane.b32.xlu0 %v572, 96
        %v585 = vpop.permute.xlu0 %584
        %586 = vrot.lane.b32.xlu0 %v581, 96
        %v587 = vpop.permute.xlu0 %586
        %vm588 = vcmask 785408
        %v589 = vsel %vm588, %v583, %v585
        %v590 = vsel %vm588, %v585, %v587
        %v592 = vcombine.low %v406, %v406
        %v594 = vunpack.c.l.s4 1983009808
        %v595 = vunpack.c.0.s8 %v594
        %v596 = vlaneseq
        %v597 = vshrl.u32 %v596, 7
        %v598 = vsub.s32 %v595, %v597
        %v599 = vrot.slane %v592, %v598
        %v601 = vunpack.c.l.s4 1983009808
        %v602 = vunpack.c.0.s8 %v601
        %v603 = vlaneseq
        %v604 = vshrl.u32 %v603, 7
        %v605 = vsub.s32 %v602, %v604
        %v606 = vrot.slane %v406, %v605
        %v607 = vcombine.low %v599, %v599
        %v608 = vcombine.low %v606, %v606
        %609 = vrot.lane.b32.xlu0 %v607, 95
        %v610 = vpop.permute.xlu0 %609
        %611 = vrot.lane.b32.xlu0 %v599, 95
        %v612 = vpop.permute.xlu0 %611
        %613 = vrot.lane.b32.xlu0 %v608, 95
        %v614 = vpop.permute.xlu0 %613
        %vm615 = vcmask 777216
        %v616 = vsel %vm615, %v610, %v612
        %v617 = vsel %vm615, %v612, %v614
        %v619 = vcombine.high %v427, %v427
        %v621 = vunpack.c.l.s4 1983009808
        %v622 = vunpack.c.0.s8 %v621
        %v623 = vlaneseq
        %v624 = vshrl.u32 %v623, 7
        %v625 = vsub.s32 %v622, %v624
        %v626 = vrot.slane %v427, %v625
        %v628 = vunpack.c.l.s4 1983009808
        %v629 = vunpack.c.0.s8 %v628
        %v630 = vlaneseq
        %v631 = vshrl.u32 %v630, 7
        %v632 = vsub.s32 %v629, %v631
        %v633 = vrot.slane %v619, %v632
        %v634 = vcombine.high %v626, %v626
        %635 = vrot.lane.b32.xlu0 %v626, 94
        %v636 = vpop.permute.xlu0 %635
        %637 = vrot.lane.b32.xlu0 %v634, 94
        %v638 = vpop.permute.xlu0 %637
        %639 = vrot.lane.b32.xlu0 %v633, 94
        %v640 = vpop.permute.xlu0 %639
        %vm641 = vcmask 769024
        %v642 = vsel %vm641, %v636, %v638
        %v643 = vsel %vm641, %v638, %v640
        %vm644 = vcmask 1041408
        %v647 = vsel %vm644, %v436, %v468
        %v650 = vsel %vm644, %v444, %v469
        %v653 = vsel %vm644, %v443, %v467
        %vm654 = vcmask 1043456
        %v656 = vsel %vm654, %v647, %v495
        %v658 = vsel %vm654, %v650, %v496
        %v660 = vsel %vm654, %v653, %v493
        %vm661 = vcmask 1045504
        %v663 = vsel %vm661, %v656, %v522
        %v665 = vsel %vm661, %v658, %v523
        %v667 = vsel %vm661, %v660, %v520
        %v670 = vsel %vm644, %v534, %v556
        %v673 = vsel %vm644, %v537, %v562
        %v676 = vsel %vm644, %v536, %v563
        %v678 = vsel %vm654, %v670, %v583
        %v680 = vsel %vm654, %v673, %v589
        %v682 = vsel %vm654, %v676, %v590
        %v684 = vsel %vm661, %v678, %v610
        %v686 = vsel %vm661, %v680, %v616
        %v688 = vsel %vm661, %v682, %v617
        %v691 = vunpack.c.l.b16 %v310
        %v692 = vunpack.c.l.b16 %v311
        %v693 = vpack.c.b16 %v692, %v691
        %700 = vrot.lane.b32.xlu0 %v663, 17
        %v701 = vpop.permute.xlu0 %700
        %702 = vrot.lane.b32.xlu0 %v665, 17
        %v703 = vpop.permute.xlu0 %702
        %704 = vrot.lane.b32.xlu0 %v667, 17
        %v705 = vpop.permute.xlu0 %704
        %706 = vrot.lane.b32.xlu0 %v684, 17
        %v707 = vpop.permute.xlu0 %706
        %708 = vrot.lane.b32.xlu0 %v686, 17
        %v709 = vpop.permute.xlu0 %708
        %710 = vrot.lane.b32.xlu0 %v688, 17
        %v711 = vpop.permute.xlu0 %710
        %712 = vrot.lane.b32.xlu0 %v636, 17
        %v713 = vpop.permute.xlu0 %712
        %714 = vrot.lane.b32.xlu0 %v642, 17
        %v715 = vpop.permute.xlu0 %714
        %716 = vrot.lane.b32.xlu0 %v643, 17
        %v717 = vpop.permute.xlu0 %716
        %v718 = vsel %vm424, %v701, %v703
        %v719 = vsel %vm424, %v703, %v705
        %v720 = vsel %vm424, %v707, %v709
        %v721 = vsel %vm424, %v709, %v711
        %v722 = vsel %vm424, %v713, %v715
        %v723 = vsel %vm424, %v715, %v717
        %vm728 = vcmask 293888
        %v730 = vsel %vm728, %v693, 0
        %v733 = vsel %vm644, %v722, 0
        %v736 = vsel %vm644, %v723, 0
        %738 = vmatprep.subr.bf16.mxu0 0
        %739 = vmatpush1.bf16.msra.mxu0 0
        %740 = vmatprep.subr.bf16.mxu0 0
        %741 = vmatpush1.bf16.msra.mxu0 0
        %742 = vmatprep.subr.bf16.mxu0 0
        %743 = vmatpush1.bf16.msra.mxu0 0
        %744 = vmatprep.subr.bf16.mxu0 0
        %745 = vmatpush1.bf16.msra.mxu0 0
        %746 = vmatprep.subr.bf16.mxu0 0
        %747 = vmatpush1.bf16.msra.mxu0 0
        %748 = vmatprep.subr.bf16.mxu0 %v736
        %749 = vmatpush1.bf16.msra.mxu0 %v733
        %750 = vmatprep.subr.bf16.mxu0 %v721
        %751 = vmatpush1.bf16.msra.mxu0 %v720
        %752 = vmatprep.subr.bf16.mxu0 %v719
        %753 = vmatpush1.bf16.msra.mxu0 %v718
        %754 = vmatprep.subr.bf16.mxu0 0
        %755 = vmatpush2.bf16.msra.mxu0 0
        %756 = vmatprep.subr.bf16.mxu0 0
        %757 = vmatpush2.bf16.msra.mxu0 0
        %758 = vmatprep.subr.bf16.mxu0 0
        %759 = vmatpush2.bf16.msra.mxu0 0
        %760 = vmatprep.subr.bf16.mxu0 0
        %761 = vmatpush2.bf16.msra.mxu0 0
        %762 = vmatprep.subr.bf16.mxu0 0
        %763 = vmatpush2.bf16.msra.mxu0 0
        %764 = vmatprep.subr.bf16.mxu0 0
        %765 = vmatpush2.bf16.msra.mxu0 0
        %766 = vmatprep.subr.bf16.mxu0 0
        %767 = vmatpush2.bf16.msra.mxu0 0
        %768 = vmatprep.subr.bf16.mxu0 0
        %769 = vmatpush2.bf16.msra.mxu0 0
        %770 = vmatprep.mubr.bf16.mxu0 0
        %771 = vmatmul.mubr.bf16.gmra.mxu0 %v730
        %v772 = vpop.f32.mrf.mxu0
        %v773 = vadd.f32 0.0, %v772
        %v774 = vpop.f32.mrf.mxu0
        %v775 = vadd.f32 0.0, %v774
        %v776 = vpop.f32.mrf.mxu0
        %v777 = vadd.f32 0.0, %v776
        %v778 = vpop.f32.mrf.mxu0
        %v779 = vadd.f32 0.0, %v778
        %780 = vdwg.mxu0
        %v781 = vld [vmem:[%s4] sm:$0xff]
        %783 = vset.pattern.permute.xlu0 0
        %784 = vperm.xlu0 %783, %v781
        %v785 = vpop.permute.xlu0 %784
        %v787 = vadd.f32 %v773, %v785
        %v788 = vadd.f32 %v775, %v785
        %v789 = vmax.f32 %v787, 0.0
        %v790 = vmax.f32 %v788, 0.0
        %791 = vset.pattern.permute.xlu0 2
        %792 = vperm.xlu0 %791, %v781
        %v793 = vpop.permute.xlu0 %792
        %v795 = vadd.f32 %v777, %v793
        %v796 = vadd.f32 %v779, %v793
        %797 = vst [vmem:[#allocation3] sm:$0xf] 0
        %798 = vst [vmem:[#allocation3 + $0xc] sm:$0xf] 0
        %v799 = vpack.c.bf16 %v789, %v789
        %v800 = vpack.c.bf16 %v790, %v790
        %v803 = vunpack.c.l.b16 %v799
        %v804 = vunpack.c.l.b16 %v800
        %v805 = vpack.c.b16 %v804, %v803
        %807 = vst [vmem:[#allocation3 + $0x4] sm:$0xff] %v805
        %v808 = vld [vmem:[%s2] sm:$0xf]
        %v809 = vld [vmem:[#allocation3] sm:$0xff]
        %v810 = vld [vmem:[#allocation3 + $0x8] sm:$0xf]
        %v811 = vunpack.c.l.b16 %v342
        %v812 = vunpack.c.l.b16 %v349
        %v813 = vpack.c.b16 %v812, %v811
        %814 = vrot.lane.b32.xlu0 %v813, 111
        %v815 = vpop.permute.xlu0 %814
        %v816 = vrot.slane %v815, 4
        %v817 = vsel %vm363, %v816, %v815
        %v820 = vmul.bf16 %v809, %v817
        %v821 = vmul.bf16 %v810, %v816
        %v822 = vunpack.c.l.b16 %v373
        %v823 = vunpack.c.l.b16 %v380
        %v824 = vpack.c.b16 %v823, %v822
        %825 = vrot.lane.b32.xlu0 %v824, 113
        %v826 = vpop.permute.xlu0 %825
        %v827 = vrot.slane %v826, 4
        %v828 = vsel %vm394, %v827, %v826
        %v831 = vmul.bf16 %v809, %v828
        %v832 = vmul.bf16 %v810, %v827
        %833 = vrot.lane.b32.xlu0 %v813, 127
        %v834 = vpop.permute.xlu0 %833
        %v835 = vrot.slane %v834, 4
        %v836 = vsel %vm401, %v835, %v834
        %v839 = vmul.bf16 %v809, %v836
        %v840 = vmul.bf16 %v810, %v835
        %v841 = vld [vmem:[#allocation3 + $0x4] sm:$0xff]
        %v842 = vld [vmem:[#allocation3 + $0x4] sm:$0xff]
        %v843 = vld [vmem:[#allocation3 + $0xc] sm:$0xf]
        %844 = vrot.lane.b32.xlu0 %v824, 1
        %v845 = vpop.permute.xlu0 %844
        %v846 = vrot.slane %v845, 4
        %v847 = vsel %vm410, %v846, %v845
        %v850 = vmul.bf16 %v842, %v847
        %v851 = vmul.bf16 %v843, %v846
        %852 = vrot.lane.b32.xlu0 %v813, 15
        %v853 = vpop.permute.xlu0 %852
        %v854 = vrot.slane %v853, 4
        %v855 = vsel %vm417, %v854, %v853
        %v858 = vmul.bf16 %v842, %v855
        %v859 = vmul.bf16 %v843, %v854
        %860 = vrot.lane.b32.xlu0 %v824, 17
        %v861 = vpop.permute.xlu0 %860
        %v862 = vrot.slane %v861, 4
        %v863 = vsel %vm424, %v862, %v861
        %v866 = vmul.bf16 %v842, %v863
        %v867 = vmul.bf16 %v843, %v862
        %v870 = vunpack.c.l.b16 %v820
        %v871 = vunpack.c.h.b16 %v820
        %v872 = vunpack.c.l.b16 %v821
        %v873 = vpack.c.b16 %v870, %v870
        %v874 = vpack.c.b16 %v871, %v871
        %v875 = vpack.c.b16 %v872, %v872
        %v878 = vunpack.c.l.b16 %v809
        %v879 = vunpack.c.h.b16 %v809
        %v880 = vunpack.c.l.b16 %v810
        %v881 = vpack.c.b16 %v878, %v878
        %v882 = vpack.c.b16 %v879, %v879
        %v883 = vpack.c.b16 %v880, %v880
        %884 = vrot.lane.b32.xlu0 %v881, 127
        %v885 = vpop.permute.xlu0 %884
        %886 = vrot.lane.b32.xlu0 %v882, 127
        %v887 = vpop.permute.xlu0 %886
        %888 = vrot.lane.b32.xlu0 %v883, 127
        %v889 = vpop.permute.xlu0 %888
        %v890 = vsel %vm401, %v885, %v887
        %v891 = vsel %vm401, %v887, %v889
        %v894 = vunpack.c.l.b16 %v831
        %v895 = vunpack.c.h.b16 %v831
        %v896 = vunpack.c.l.b16 %v832
        %v897 = vpack.c.b16 %v894, %v894
        %v898 = vpack.c.b16 %v895, %v895
        %v899 = vpack.c.b16 %v896, %v896
        %900 = vrot.lane.b32.xlu0 %v897, 126
        %v901 = vpop.permute.xlu0 %900
        %902 = vrot.lane.b32.xlu0 %v898, 126
        %v903 = vpop.permute.xlu0 %902
        %904 = vrot.lane.b32.xlu0 %v899, 126
        %v905 = vpop.permute.xlu0 %904
        %v906 = vsel %vm494, %v901, %v903
        %v907 = vsel %vm494, %v903, %v905
        %v910 = vunpack.c.l.b16 %v839
        %v911 = vunpack.c.h.b16 %v839
        %v912 = vunpack.c.l.b16 %v840
        %v913 = vpack.c.b16 %v910, %v910
        %v914 = vpack.c.b16 %v911, %v911
        %v915 = vpack.c.b16 %v912, %v912
        %916 = vrot.lane.b32.xlu0 %v913, 112
        %v917 = vpop.permute.xlu0 %916
        %918 = vrot.lane.b32.xlu0 %v914, 112
        %v919 = vpop.permute.xlu0 %918
        %920 = vrot.lane.b32.xlu0 %v915, 112
        %v921 = vpop.permute.xlu0 %920
        %v922 = vsel %vm521, %v917, %v919
        %v923 = vsel %vm521, %v919, %v921
        %v925 = vunpack.c.l.b16 %v841
        %v926 = vunpack.c.h.b16 %v841
        %v927 = vpack.c.b16 %v925, %v925
        %v928 = vpack.c.b16 %v926, %v926
        %929 = vrot.lane.b32.xlu0 %v927, 111
        %v930 = vpop.permute.xlu0 %929
        %931 = vrot.lane.b32.xlu0 %v928, 111
        %v932 = vpop.permute.xlu0 %931
        %v933 = vsel %vm363, %v930, %v932
        %v936 = vunpack.c.l.b16 %v850
        %v937 = vunpack.c.h.b16 %v850
        %v938 = vunpack.c.l.b16 %v851
        %v939 = vpack.c.b16 %v936, %v936
        %v940 = vpack.c.b16 %v937, %v937
        %v941 = vpack.c.b16 %v938, %v938
        %942 = vrot.lane.b32.xlu0 %v939, 110
        %v943 = vpop.permute.xlu0 %942
        %944 = vrot.lane.b32.xlu0 %v940, 110
        %v945 = vpop.permute.xlu0 %944
        %946 = vrot.lane.b32.xlu0 %v941, 110
        %v947 = vpop.permute.xlu0 %946
        %v948 = vsel %vm561, %v943, %v945
        %v949 = vsel %vm561, %v945, %v947
        %v952 = vunpack.c.l.b16 %v858
        %v953 = vunpack.c.h.b16 %v858
        %v954 = vunpack.c.l.b16 %v859
        %v955 = vpack.c.b16 %v952, %v952
        %v956 = vpack.c.b16 %v953, %v953
        %v957 = vpack.c.b16 %v954, %v954
        %958 = vrot.lane.b32.xlu0 %v955, 96
        %v959 = vpop.permute.xlu0 %958
        %960 = vrot.lane.b32.xlu0 %v956, 96
        %v961 = vpop.permute.xlu0 %960
        %962 = vrot.lane.b32.xlu0 %v957, 96
        %v963 = vpop.permute.xlu0 %962
        %v964 = vsel %vm588, %v959, %v961
        %v965 = vsel %vm588, %v961, %v963
        %v968 = vunpack.c.l.b16 %v842
        %v969 = vunpack.c.h.b16 %v842
        %v970 = vunpack.c.l.b16 %v843
        %v971 = vpack.c.b16 %v968, %v968
        %v972 = vpack.c.b16 %v969, %v969
        %v973 = vpack.c.b16 %v970, %v970
        %974 = vrot.lane.b32.xlu0 %v971, 95
        %v975 = vpop.permute.xlu0 %974
        %976 = vrot.lane.b32.xlu0 %v972, 95
        %v977 = vpop.permute.xlu0 %976
        %978 = vrot.lane.b32.xlu0 %v973, 95
        %v979 = vpop.permute.xlu0 %978
        %v980 = vsel %vm615, %v975, %v977
        %v981 = vsel %vm615, %v977, %v979
        %v984 = vunpack.c.l.b16 %v866
        %v985 = vunpack.c.h.b16 %v866
        %v986 = vunpack.c.l.b16 %v867
        %v987 = vpack.c.b16 %v984, %v984
        %v988 = vpack.c.b16 %v985, %v985
        %v989 = vpack.c.b16 %v986, %v986
        %990 = vrot.lane.b32.xlu0 %v987, 94
        %v991 = vpop.permute.xlu0 %990
        %992 = vrot.lane.b32.xlu0 %v988, 94
        %v993 = vpop.permute.xlu0 %992
        %994 = vrot.lane.b32.xlu0 %v989, 94
        %v995 = vpop.permute.xlu0 %994
        %v996 = vsel %vm641, %v991, %v993
        %v997 = vsel %vm641, %v993, %v995
        %v1000 = vsel %vm654, %v873, %v890
        %v1003 = vsel %vm654, %v874, %v891
        %v1006 = vsel %vm654, %v875, %v889
        %v1009 = vsel %vm654, %v906, %v922
        %v1012 = vsel %vm654, %v907, %v923
        %v1015 = vsel %vm654, %v905, %v921
        %v1018 = vsel %vm654, %v930, %v943
        %v1021 = vsel %vm654, %v933, %v948
        %v1024 = vsel %vm654, %v932, %v949
        %v1027 = vsel %vm654, %v959, %v975
        %v1030 = vsel %vm654, %v964, %v980
        %v1033 = vsel %vm654, %v965, %v981
        %v1034 = vld [vmem:[%s4] sm:$0xff]
        %1036 = vset.pattern.permute.xlu0 1
        %1037 = vperm.xlu0 %1036, %v1034
        %v1038 = vpop.permute.xlu0 %1037
        %1052 = vrot.lane.b32.xlu0 %v1000, 17
        %v1053 = vpop.permute.xlu0 %1052
        %1054 = vrot.lane.b32.xlu0 %v1003, 17
        %v1055 = vpop.permute.xlu0 %1054
        %1056 = vrot.lane.b32.xlu0 %v1006, 17
        %v1057 = vpop.permute.xlu0 %1056
        %1058 = vrot.lane.b32.xlu0 %v1009, 17
        %v1059 = vpop.permute.xlu0 %1058
        %1060 = vrot.lane.b32.xlu0 %v1012, 17
        %v1061 = vpop.permute.xlu0 %1060
        %1062 = vrot.lane.b32.xlu0 %v1015, 17
        %v1063 = vpop.permute.xlu0 %1062
        %1064 = vrot.lane.b32.xlu0 %v1018, 17
        %v1065 = vpop.permute.xlu0 %1064
        %1066 = vrot.lane.b32.xlu0 %v1021, 17
        %v1067 = vpop.permute.xlu0 %1066
        %1068 = vrot.lane.b32.xlu0 %v1024, 17
        %v1069 = vpop.permute.xlu0 %1068
        %1070 = vrot.lane.b32.xlu0 %v1027, 17
        %v1071 = vpop.permute.xlu0 %1070
        %1072 = vrot.lane.b32.xlu0 %v1030, 17
        %v1073 = vpop.permute.xlu0 %1072
        %1074 = vrot.lane.b32.xlu0 %v1033, 17
        %v1075 = vpop.permute.xlu0 %1074
        %1076 = vrot.lane.b32.xlu0 %v991, 17
        %v1077 = vpop.permute.xlu0 %1076
        %1078 = vrot.lane.b32.xlu0 %v996, 17
        %v1079 = vpop.permute.xlu0 %1078
        %1080 = vrot.lane.b32.xlu0 %v997, 17
        %v1081 = vpop.permute.xlu0 %1080
        %v1082 = vsel %vm424, %v1053, %v1055
        %v1083 = vsel %vm424, %v1055, %v1057
        %v1084 = vsel %vm424, %v1059, %v1061
        %v1085 = vsel %vm424, %v1061, %v1063
        %v1086 = vsel %vm424, %v1065, %v1067
        %v1087 = vsel %vm424, %v1067, %v1069
        %v1088 = vsel %vm424, %v1071, %v1073
        %v1089 = vsel %vm424, %v1073, %v1075
        %v1090 = vsel %vm424, %v1077, %v1079
        %v1091 = vsel %vm424, %v1079, %v1081
        %vm1100 = vcmask 588800
        %v1102 = vsel %vm1100, %v808, 0
        %v1105 = vsel %vm654, %v1090, 0
        %v1108 = vsel %vm654, %v1091, 0
        %1110 = vmatprep.subr.bf16.mxu0 0
        %1111 = vmatpush1.bf16.msra.mxu0 0
        %1112 = vmatprep.subr.bf16.mxu0 0
        %1113 = vmatpush1.bf16.msra.mxu0 0
        %1114 = vmatprep.subr.bf16.mxu0 0
        %1115 = vmatpush1.bf16.msra.mxu0 0
        %1116 = vmatprep.subr.bf16.mxu0 %v1108
        %1117 = vmatpush1.bf16.msra.mxu0 %v1105
        %1118 = vmatprep.subr.bf16.mxu0 %v1089
        %1119 = vmatpush1.bf16.msra.mxu0 %v1088
        %1120 = vmatprep.subr.bf16.mxu0 %v1087
        %1121 = vmatpush1.bf16.msra.mxu0 %v1086
        %1122 = vmatprep.subr.bf16.mxu0 %v1085
        %1123 = vmatpush1.bf16.msra.mxu0 %v1084
        %1124 = vmatprep.subr.bf16.mxu0 %v1083
        %1125 = vmatpush1.bf16.msra.mxu0 %v1082
        %1126 = vmatprep.subr.bf16.mxu0 0
        %1127 = vmatpush2.bf16.msra.mxu0 0
        %1128 = vmatprep.subr.bf16.mxu0 0
        %1129 = vmatpush2.bf16.msra.mxu0 0
        %1130 = vmatprep.subr.bf16.mxu0 0
        %1131 = vmatpush2.bf16.msra.mxu0 0
        %1132 = vmatprep.subr.bf16.mxu0 0
        %1133 = vmatpush2.bf16.msra.mxu0 0
        %1134 = vmatprep.subr.bf16.mxu0 0
        %1135 = vmatpush2.bf16.msra.mxu0 0
        %1136 = vmatprep.subr.bf16.mxu0 0
        %1137 = vmatpush2.bf16.msra.mxu0 0
        %1138 = vmatprep.subr.bf16.mxu0 0
        %1139 = vmatpush2.bf16.msra.mxu0 0
        %1140 = vmatprep.subr.bf16.mxu0 0
        %1141 = vmatpush2.bf16.msra.mxu0 0
        %1142 = vmatprep.mubr.bf16.mxu0 0
        %1143 = vmatmul.mubr.bf16.gmra.mxu0 %v1102
        %v1144 = vpop.f32.mrf.mxu0
        %v1145 = vadd.f32 %v1038, %v1144
        %v1146 = vpop.f32.mrf.mxu0
        %v1147 = vadd.f32 %v1038, %v1146
        %v1148 = vpop.f32.mrf.mxu0
        %v1149 = vpop.f32.mrf.mxu0
        %1150 = vdwg.mxu0
        %v1151 = vadd.f32 %v1145, %v1147
        %1152 = vadd.xlane.f32.xlu0 %v1151
        %v1153 = vpop.xlane.xlu0 %1152
        %v1154 = vrcp.pop 256.0
        %v1155 = vmul.f32 %v1153, %v1154
        %v1156 = vld [vmem:[%s5] sm:$0xff]
        %v1157 = vmul.f32 %v1156, %v1155
        %vm1158 = vcmask 15360
        %v1159 = vsel %vm1158, %v1157, 0.0
        %v1160 = vrot.slane %v1159, 4
        %v1161 = vadd.f32 %v1159, %v1160
        %v1162 = vrot.slane %v1161, 2
        %v1163 = vadd.f32 %v1161, %v1162
        %v1164 = vrot.slane %v1163, 1
        %v1165 = vadd.f32 %v1163, %v1164
        %v1166 = vld [vmem:[%s6] sm:$0x1]
        %v1167 = vadd.f32 %v1165, %v1166
        %v1168 = vmax.f32 %v1167, 0.0
        %v1169 = vld [vmem:[%s7] sm:$0xff]
        %v1170 = vlaneseq
        %v1171 = vshrl.u32 %v1170, 7
        %v1172 = vsub.s32 0, %v1171
        %v1173 = vrot.slane %v1168, %v1172
        %v1174 = vmul.f32 %v1169, %v1173
        %v1175 = vsel %vm1158, %v1174, 0.0
        %1176 = vadd.xlane.f32.xlu0 %v1175
        %v1177 = vpop.xlane.xlu0 %1176
        %v1178 = vadd.f32 %v1177, %v1034
        %v1179 = vxor.u32 %v1178, 2147483648
        %v1180 = vmul.f32 %v1179, 1.442695
        %v1181 = vpow.pop %v1180
        %v1182 = vadd.f32 %v1181, 1.0
        %v1183 = vrcp.pop %v1182
        %v1184 = vmul.f32 1.0, %v1183
        %1186 = vset.pattern.permute.xlu0 3
        %1187 = vperm.xlu0 %1186, %v1184
        %v1188 = vpop.permute.xlu0 %1187
        %v1190 = vmul.f32 %v1145, %v1188
        %v1191 = vmul.f32 %v1147, %v1188
        %v1192 = vadd.f32 %v1190, %v795
        %v1193 = vadd.f32 %v1191, %v796
        %v1194 = vmax.f32 %v1192, 0.0
        %v1195 = vmax.f32 %v1193, 0.0
        %1196 = vst [vmem:[%s298] sm:$0xff] %v1194
        %1197 = vst [vmem:[%s298 + $0x8] sm:$0xff] %v1195
        %s1198 = sand.u32 %s203, 1
        %s1199 = scalar_lea.sflag [#allocation5], %s1198
        %s1200 = sand.u32 %s203, 1
        %s1201 = smul.addr %s1200, 16
        %s1202 = scalar_lea.vmem [#allocation4], %s1201
        // Predicated region
        $region53: #{tpu_custom_call.1} parent=51 // pred_check
          %p1203 = pneg %p213
        $region54: #{tpu_custom_call.1} parent=51 // pred_check_branch
          %1205 = sbr.rel (%p1203) target = $region56
        $region55: #{tpu_custom_call.1} parent=51 // pred_region
          %s1207 = ssub.s32 256, 256
          %1208 = vsyncadd %s1199, %s1207
          %s1209 = smul.addr %s22, 2
          %s1210 = smul.addr %s1209, 128
          %s1211 = scalar_lea.hbm %s8, %s1210
          %s1213 = sshll.u32 %s1202, 4
          %s1214 = int_to_ptr.vmem [resolvable:$true] %s1213
          %1216 = dma.vmem_to_hbm [thread:$0]  %s1214, 256, %s1211, %s1199
        $region56: #{tpu_custom_call.1} parent=51 // pred_fallthru
          _
      $region52: #{tpu_custom_call.1} parent=5 // pred_fallthru
        _
      %p1217 = scmp.le.s32.totalorder 2, %s17
      // Predicated region
      $region57: #{tpu_custom_call.1} parent=5 // pred_check
        %p1218 = pneg %p1217
      $region58: #{tpu_custom_call.1} parent=5 // pred_check_branch
        %1220 = sbr.rel (%p1218) target = $region60
      $region59: #{tpu_custom_call.1} parent=5 // pred_region
        %s1221 = ssub.s32 %s17, 2
        // Predicated region
        $region61: #{tpu_custom_call.1} parent=59 // pred_check
          %p1222 = pneg %p219
        $region62: #{tpu_custom_call.1} parent=59 // pred_check_branch
          %1224 = sbr.rel (%p1222) target = $region64
        $region63: #{tpu_custom_call.1} parent=59 // pred_region
          %s1225 = sand.u32 %s204, 1
          %s1226 = scalar_lea.sflag [#allocation5], %s1225
          %s1227 = sand.u32 %s204, 1
          %s1228 = smul.addr %s1227, 16
          %s1229 = scalar_lea.vmem [#allocation4], %s1228
          %1230 = dma.done %s1226, 256
        $region64: #{tpu_custom_call.1} parent=59 // pred_fallthru
          _
      $region60: #{tpu_custom_call.1} parent=5 // pred_fallthru
        _
    $region6: #{tpu_custom_call.1} parent=1 // loop_footer
      %s21 = sadd.s32 1, %s17
    $region7: #{tpu_custom_call.1} parent=1 // loop_footer_branch
      %16 = sbr.rel target = $region3
    $region8: #{tpu_custom_call.1} parent=1 // loop_exit
      _
    %1231 = vsyncpa [#allocation5], 1
    %s1232 = scalar_lea.sflag [#allocation5], 1
    %1233 = vsyncpa %s1232, 1

</llo_original>
